<compile_context>
chip_gen: v7x
topology: tpu7x:2x2x1
jax: 0.10.0
libtpu: 0.0.40
codegen_flags: <defaults>
</compile_context>

<pallas_src>
import functools

import jax
import jax.numpy as jnp
from jax.experimental import pallas as pl
from jax.experimental.pallas import tpu as pltpu

_LANE = 128                       # output lane width for unmasked stores
_MAX_T_TILE = 1024                # rows per time tile when T is long (multiple of 8)
_ROWS_TARGET = 1024               # target matmul rows (bb * tt) per grid step
_MAX_BB = 64                      # cap on batch elements unrolled per step
_VMEM_BUDGET = 24 * 1024 * 1024   # working-set budget (headroom under the 32 MiB scoped limit)
_VMEM_LIMIT = 32 * 1024 * 1024    # explicit scoped-VMEM limit (safe on v5e/v6e/v7x)


def _round_up(x, m):
    return (x + m - 1) // m * m


def _input_process_kernel(x_ref, w_ref, b_ref, o_ref, *, bb, tt, dp, fused):
    # x_ref: [bb, tt, C]   (bb batch elements, tt time steps)
    # w_ref: [C, Dp]       (pre-transposed, lane-padded weight; resident across the grid)
    # b_ref: [1, Dp]
    # o_ref: [tt, bb*Dp]   (lane-dense time-major output block)
    w = w_ref[...]
    bias = b_ref[...]
    if fused and bb > 1:
        # One tall MXU matmul over all bb*tt rows (tt % 8 == 0 -> relayout-free reshape),
        # then bb static, 128-aligned Dp-wide column stores.
        x2d = x_ref[...].reshape(bb * tt, -1)
        y = (jnp.dot(x2d, w, preferred_element_type=jnp.float32) + bias).astype(o_ref.dtype)
        for i in range(bb):
            o_ref[:, i * dp:(i + 1) * dp] = y[i * tt:(i + 1) * tt, :]
    else:
        # Fallback (bb == 1, or tt not 8-aligned): per-batch-element matmuls.
        for i in range(bb):
            acc = jnp.dot(x_ref[i], w, preferred_element_type=jnp.float32)
            o_ref[:, i * dp:(i + 1) * dp] = (acc + bias).astype(o_ref.dtype)


def prepare_input_process_params(weight, bias):
    """One-time parameter prep (do at load time, not per call).

    nn.Linear stores weight as [latent_dim, input_feats]; store it pre-transposed to
    [input_feats, latent_dim] and lane-pad latent_dim up to a multiple of 128."""
    d, c = weight.shape
    dp = _round_up(d, _LANE)
    w_cd = jnp.zeros((c, dp), dtype=weight.dtype).at[:, :d].set(weight.T)
    b2d = jnp.zeros((1, dp), dtype=bias.dtype).at[0, :d].set(bias)
    return w_cd, b2d, d


def _choose_tiles(B, T, C, Dp, x_isz, o_isz, w_isz):
    """Pick (tt, bb, nt, nb): tt time rows and bb batch elements per grid step."""
    tt = T if T <= _MAX_T_TILE else _MAX_T_TILE          # full T (legal as full-dim block) or 8-mult tile
    bb = max(1, min(_ROWS_TARGET // _round_up(tt, 8), B, _MAX_BB))

    def step_bytes(bb_, tt_):
        rows = _round_up(tt_, 8)
        # double-buffered x block + out block, plus (double-buffered) weight + bias
        return (2 * bb_ * rows * (C * x_isz + Dp * o_isz)
                + 2 * (C * Dp * w_isz + Dp * o_isz))

    while bb > 1 and step_bytes(bb, tt) > _VMEM_BUDGET:
        bb -= 1
    while tt > 8 and step_bytes(bb, tt) > _VMEM_BUDGET:
        tt = max(8, _round_up(tt // 2, 8))

    nt = pl.cdiv(T, tt)
    # v7x megacore: if the time axis has a single tile, keep >= 2 batch groups so the
    # parallel grid can split across the two TensorCores.
    if nt == 1 and B > 1 and pl.cdiv(B, bb) < 2:
        bb = (B + 1) // 2
    nb = pl.cdiv(B, bb)
    return tt, bb, nt, nb


@functools.partial(jax.jit, static_argnames=("latent_dim",))
def input_process_forward(x, w_cd, b2d, *, latent_dim):
    """x: [B, T, C] -> [T, B, latent_dim]   ('b t c -> t b c' + poseEmbedding Linear)."""
    B, T, C = x.shape
    Dp = w_cd.shape[1]

    x_isz = jnp.dtype(x.dtype).itemsize
    o_isz = x_isz
    w_isz = jnp.dtype(w_cd.dtype).itemsize

    tt, bb, nt, nb = _choose_tiles(B, T, C, Dp, x_isz, o_isz, w_isz)
    fused = (tt % 8 == 0)

    cost = pl.CostEstimate(
        flops=2 * B * T * C * Dp,
        transcendentals=0,
        bytes_accessed=(B * T * C * x_isz + T * B * Dp * o_isz
                        + C * Dp * w_isz + Dp * w_isz),
    )

    kernel = functools.partial(_input_process_kernel, bb=bb, tt=tt, dp=Dp, fused=fused)

    # Output laid out as [T, B*Dp]: block (tt, bb*Dp) at block-index (t, b) lands exactly at
    # rows t*tt:(t+1)*tt, cols (b*bb)*Dp:(b*bb+bb)*Dp == the time-major [T, B, Dp] slab
    # (free reshape after). Ragged T / B tails are handled by Pallas boundary clipping/masking.
    out2d = pl.pallas_call(
        kernel,
        out_shape=jax.ShapeDtypeStruct((T, B * Dp), x.dtype),
        grid_spec=pl.GridSpec(
            grid=(nb, nt),  # time innermost -> contiguous input streaming per batch group
            in_specs=[
                pl.BlockSpec((bb, tt, C), lambda b, t: (b, t, 0)),  # x[b*bb:(b+1)*bb, t*tt:(t+1)*tt, :]
                pl.BlockSpec((C, Dp), lambda b, t: (0, 0)),         # weight, same block every step
                pl.BlockSpec((1, Dp), lambda b, t: (0, 0)),         # bias,   same block every step
            ],
            out_specs=pl.BlockSpec((tt, bb * Dp), lambda b, t: (t, b)),
        ),
        compiler_params=pltpu.CompilerParams(
            dimension_semantics=("parallel", "parallel"),  # independent axes -> megacore-shardable
            vmem_limit_bytes=_VMEM_LIMIT,
        ),
        cost_estimate=cost,
    )(x, w_cd, b2d)

    out = out2d.reshape(T, B, Dp)  # free: splits the trailing dim only
    if Dp != latent_dim:
        # TODO(synk): downstream ops could consume the padded [T, B, Dp] tensor directly to
        # avoid this extra HBM pass; kept here to preserve the module's output shape.
        out = out[:, :, :latent_dim]
    return out


if __name__ == "__main__":
    key = jax.random.PRNGKey(0)

    def run_case(B, T, C, D, case_key):
        kx, kw, kb = jax.random.split(case_key, 3)
        x = jax.random.normal(kx, (B, T, C), dtype=jnp.float32)
        # deterministic synthetic parameters (nn.Linear(input_feats, latent_dim) shapes)
        bound = 1.0 / jnp.sqrt(jnp.float32(C))
        weight = jax.random.uniform(kw, (D, C), minval=-bound, maxval=bound, dtype=jnp.float32)
        bias = jax.random.uniform(kb, (D,), minval=-bound, maxval=bound, dtype=jnp.float32)

        # one-time param prep (pre-transpose + lane-pad), kept out of the per-call path
        w_cd, b2d, latent = prepare_input_process_params(weight, bias)

        out = jax.block_until_ready(input_process_forward(x, w_cd, b2d, latent_dim=latent))

        ref = jnp.einsum("tbc,dc->tbd", jnp.transpose(x, (1, 0, 2)), weight) + bias
        assert out.shape == (T, B, D)
        assert jnp.allclose(out, ref, atol=1e-5, rtol=1e-5)

    k1, k2 = jax.random.split(key)
    # module-scale case: batch=2, seq=8, input_feats=32, latent_dim=64 (bb=1 / per-element path)
    run_case(2, 8, 32, 64, k1)
    # batch-blocked case with a ragged batch group: exercises the fused tall-matmul path
    # and masked boundary writeback (B=5 split into groups of bb=3).
    run_case(5, 16, 32, 64, k2)

    print("KERNEL_OK")
</pallas_src>

<mosaic_0001>
module attributes {stable_mosaic.version = 11 : i64} {
  func.func @_input_process_kernel(%arg0: i32, %arg1: i32, %arg2: memref<1x8x32xf32, #tpu.memory_space<vmem>>, %arg3: memref<32x128xf32, #tpu.memory_space<vmem>>, %arg4: memref<1x128xf32, #tpu.memory_space<vmem>>, %arg5: memref<8x128xf32, #tpu.memory_space<vmem>>) attributes {dimension_semantics = [#tpu.dimension_semantics<parallel>, #tpu.dimension_semantics<parallel>], iteration_bounds = array<i64: 2, 1>, scalar_prefetch = 0 : i64, scratch_operands = 0 : i64, tpu.core_type = #tpu.core_type<tc>, window_params = [{transform_indices = @transform_0, window_bounds = array<i64: 1, 8, 32>}, {pipeline_mode = #tpu.pipeline_mode<synchronous>, transform_indices = @transform_1, window_bounds = array<i64: 32, 128>}, {pipeline_mode = #tpu.pipeline_mode<synchronous>, transform_indices = @transform_2, window_bounds = array<i64: 1, 128>}, {transform_indices = @transform_3, window_bounds = array<i64: 8, 128>}]} {
    %c0 = arith.constant 0 : index
    %c0_0 = arith.constant 0 : index
    %0 = vector.load %arg3[%c0, %c0_0] : memref<32x128xf32, #tpu.memory_space<vmem>>, vector<32x128xf32>
    %c0_1 = arith.constant 0 : index
    %c0_2 = arith.constant 0 : index
    %1 = vector.load %arg4[%c0_1, %c0_2] : memref<1x128xf32, #tpu.memory_space<vmem>>, vector<1x128xf32>
    %c0_3 = arith.constant 0 : index
    %c0_4 = arith.constant 0 : index
    %c0_5 = arith.constant 0 : index
    %2 = vector.load %arg2[%c0_3, %c0_4, %c0_5] : memref<1x8x32xf32, #tpu.memory_space<vmem>>, vector<1x8x32xf32>
    %3 = vector.shape_cast %2 : vector<1x8x32xf32> to vector<8x32xf32>
    %cst = arith.constant dense<0.000000e+00> : vector<8x128xf32>
    %4 = tpu.matmul %3, %0, %cst {dimension_numbers = #tpu.dot_dimension_numbers<[1], [0], [0], [1], [0, 0, 1, 1], [], []>} : vector<8x32xf32>, vector<32x128xf32>, vector<8x128xf32> -> vector<8x128xf32>
    %5 = vector.broadcast %1 : vector<1x128xf32> to vector<8x128xf32>
    %6 = arith.addf %4, %5 : vector<8x128xf32>
    %c0_6 = arith.constant 0 : index
    %c0_7 = arith.constant 0 : index
    %7 = vector.load %arg5[%c0_6, %c0_7] : memref<8x128xf32, #tpu.memory_space<vmem>>, vector<8x128xf32>
    tpu.vector_store %arg5[%c0_6, %c0_7], %6 {strides = array<i32>} : memref<8x128xf32, #tpu.memory_space<vmem>>, vector<8x128xf32>,
    return
  }
  func.func @transform_0(%arg0: i32, %arg1: i32) -> (i32, i32, i32) {
    %c0_i32 = arith.constant 0 : i32
    %c0_i32_0 = arith.constant 0 : i32
    return %arg0, %arg1, %c0_i32 : i32, i32, i32
  }
  func.func @transform_1(%arg0: i32, %arg1: i32) -> (i32, i32) {
    %c0_i32 = arith.constant 0 : i32
    %c0_i32_0 = arith.constant 0 : i32
    %c0_i32_1 = arith.constant 0 : i32
    return %c0_i32, %c0_i32_0 : i32, i32
  }
  func.func @transform_2(%arg0: i32, %arg1: i32) -> (i32, i32) {
    %c0_i32 = arith.constant 0 : i32
    %c0_i32_0 = arith.constant 0 : i32
    %c0_i32_1 = arith.constant 0 : i32
    return %c0_i32, %c0_i32_0 : i32, i32
  }
  func.func @transform_3(%arg0: i32, %arg1: i32) -> (i32, i32) {
    %c0_i32 = arith.constant 0 : i32
    return %arg1, %arg0 : i32, i32
  }
}

</mosaic_0001>

<llo_original>
// kernel: input_process_forward.1
$region0: #{input_process_forward.1}
  #allocation0 [shape = 'u32[]', space=smem, size = 0x4, offset = 0x4, fixed_abs, tag = 'smem constant byte address 0x4 - core index']
  #allocation1 [shape = 'u32[144,128]{1,0:T(1,128)}', space=vmem, size = 0x12000, scoped, tag = 'internal scratch']
  %s0 = inlined_call_operand.hbm [shape: f32[2,8,32], index: 0, kind: input, shape index: {}]
  %s1 = inlined_call_operand.hbm [shape: f32[32,128], index: 1, kind: input, shape index: {}]
  %s2 = inlined_call_operand.vmem [shape: f32[1,128], index: 2, kind: input, shape index: {}]
  %s3 = inlined_call_operand.vmem [shape: f32[8,256], index: 3, kind: output, shape index: {}]
  %s4 = sld [smem:[#allocation0]]
  $region53: #{input_process_forward.1} parent=0
    _
  %s6 = ssub.s32 1, %s4
  %s7 = scalar_select 0, %s6, %s4
  $region1: #{input_process_forward.1} parent=0
    #allocation2 [shape = 'u8[8192]{0}', space=vmem, size = 0x2000, scoped, tag = 'input window, operand 0']
    #allocation3 [shape = 's32[2]{0}', space=sflag, size = 0x8, scoped, tag = 'scoped memory for input_process_forward.1']
    #allocation4 [shape = 'u8[16384]{0}', space=vmem, size = 0x4000, scoped, tag = 'input window, operand 1, single buffered']
    #allocation5 [shape = 's32[1]{0}', space=sflag, size = 0x4, scoped, tag = 'scoped memory for input_process_forward.1']
    %8 = vsyncpa [#allocation3], 0
    %s9 = scalar_lea.sflag [#allocation3], 1
    %10 = vsyncpa %s9, 0
    %11 = vsyncpa [#allocation5], 0
    loop: start=0, step=1, limit=4
    $region2: #{input_process_forward.1} parent=1 // loop_pre_header
      _
    $region3: #{input_process_forward.1} parent=1 // loop_header
      %s13 = sphi 0, %s17
      %p14 = scmp.ge.s32.totalorder %s13, 4
      %s20 = sphi 0, %s32
      %s21 = sphi 0, %s28
      %s22 = sphi 0, %s20
      %s23 = sphi 0, %s21
      %s24 = sphi 0, %s22
      %s25 = sphi 0, %s23
      %s37 = sphi 0, %s39
      %s40 = sphi 0, %s37
      %s41 = sphi 0, %s40
      %s57 = sphi 0, %s41
      %s61 = sphi 0, %s61
      %s63 = sphi 0, %s61
      %s64 = sphi 0, %s63
      %s78 = sphi 0, %s64
      %s82 = sphi 0, %s82
      %s84 = sphi 0, %s82
      %s85 = sphi 0, %s84
      %s99 = sphi 0, %s85
      %s107 = sphi 0, %s109
      %s110 = sphi 0, %s107
      %s111 = sphi 0, %s110
      %s127 = sphi 0, %s111
    $region4: #{input_process_forward.1} parent=1 // loop_header_branch
      %16 = sbr.rel (%p14) target = $region8
    $region5: #{input_process_forward.1} parent=1 // loop_body
      %s18 = ssub.s32 %s13, 1
      %s19 = ssub.s32 %s13, 2
      %s26 = sadd.s32 1, %s21
      %p27 = scmp.ge.s32.totalorder %s26, 1
      %s28 = scalar_select %p27, 0, %s26
      %s29 = sadd.s32 1, %s20
      %s30 = scalar_select %p27, %s29, %s20
      %p31 = scmp.ge.s32.totalorder %s30, 2
      %s32 = scalar_select %p31, 0, %s30
      %s33 = ssub.s32 %s20, %s32
      %s34 = ssub.s32 %s21, %s28
      %s35 = sor.u32 %s33, %s34
      %p36 = scmp.eq.s32.totalorder %s35, 0
      %s38 = sadd.s32 %s37, 1
      %s39 = scalar_select %p36, %s37, %s38
      %p42 = pneg %p36
      %p43 = scmp.eq.s32.totalorder %s13, 1
      %p44 = por %p42, %p43
      %p45 = scmp.ne.s32.totalorder %s37, %s40
      %p46 = scmp.eq.s32.totalorder %s13, 0
      %p47 = por %p45, %p46
      %p48 = scmp.ne.s32.totalorder %s37, %s40
      %p49 = scmp.eq.s32.totalorder %s18, 1
      %p50 = por %p48, %p49
      %p51 = scmp.ne.s32.totalorder %s40, %s41
      %p52 = scmp.eq.s32.totalorder %s18, 0
      %p53 = por %p51, %p52
      %p54 = scmp.ne.s32.totalorder %s40, %s41
      %p55 = scmp.eq.s32.totalorder %s19, 1
      %p56 = por %p54, %p55
      %p58 = scmp.ne.s32.totalorder %s41, %s57
      %p59 = scmp.eq.s32.totalorder %s19, 0
      %p60 = por %p58, %p59
      %s62 = sadd.s32 %s61, 1
      %p65 = scmp.eq.s32.totalorder %s13, 1
      %p66 = scmp.ne.s32.totalorder %s61, %s63
      %p67 = scmp.eq.s32.totalorder %s13, 0
      %p68 = por %p66, %p67
      %p69 = scmp.ne.s32.totalorder %s61, %s63
      %p70 = scmp.eq.s32.totalorder %s18, 1
      %p71 = por %p69, %p70
      %p72 = scmp.ne.s32.totalorder %s63, %s64
      %p73 = scmp.eq.s32.totalorder %s18, 0
      %p74 = por %p72, %p73
      %p75 = scmp.ne.s32.totalorder %s63, %s64
      %p76 = scmp.eq.s32.totalorder %s19, 1
      %p77 = por %p75, %p76
      %p79 = scmp.ne.s32.totalorder %s64, %s78
      %p80 = scmp.eq.s32.totalorder %s19, 0
      %p81 = por %p79, %p80
      %s83 = sadd.s32 %s82, 1
      %p86 = scmp.eq.s32.totalorder %s13, 1
      %p87 = scmp.ne.s32.totalorder %s82, %s84
      %p88 = scmp.eq.s32.totalorder %s13, 0
      %p89 = por %p87, %p88
      %p90 = scmp.ne.s32.totalorder %s82, %s84
      %p91 = scmp.eq.s32.totalorder %s18, 1
      %p92 = por %p90, %p91
      %p93 = scmp.ne.s32.totalorder %s84, %s85
      %p94 = scmp.eq.s32.totalorder %s18, 0
      %p95 = por %p93, %p94
      %p96 = scmp.ne.s32.totalorder %s84, %s85
      %p97 = scmp.eq.s32.totalorder %s19, 1
      %p98 = por %p96, %p97
      %p100 = scmp.ne.s32.totalorder %s85, %s99
      %p101 = scmp.eq.s32.totalorder %s19, 0
      %p102 = por %p100, %p101
      %s103 = ssub.s32 %s21, %s28
      %s104 = ssub.s32 %s20, %s32
      %s105 = sor.u32 %s103, %s104
      %p106 = scmp.eq.s32.totalorder %s105, 0
      %s108 = sadd.s32 %s107, 1
      %s109 = scalar_select %p106, %s107, %s108
      %p112 = pneg %p106
      %p113 = scmp.eq.s32.totalorder %s13, 1
      %p114 = por %p112, %p113
      %p115 = scmp.ne.s32.totalorder %s107, %s110
      %p116 = scmp.eq.s32.totalorder %s13, 0
      %p117 = por %p115, %p116
      %p118 = scmp.ne.s32.totalorder %s107, %s110
      %p119 = scmp.eq.s32.totalorder %s18, 1
      %p120 = por %p118, %p119
      %p121 = scmp.ne.s32.totalorder %s110, %s111
      %p122 = scmp.eq.s32.totalorder %s18, 0
      %p123 = por %p121, %p122
      %p124 = scmp.ne.s32.totalorder %s110, %s111
      %p125 = scmp.eq.s32.totalorder %s19, 1
      %p126 = por %p124, %p125
      %p128 = scmp.ne.s32.totalorder %s111, %s127
      %p129 = scmp.eq.s32.totalorder %s19, 0
      %p130 = por %p128, %p129
      %p131 = scmp.le.s32.totalorder 1, %s13
      %p132 = scmp.lt.s32.totalorder %s13, 3
      %p133 = pnand %p131, %p132
      %p134 = pneg %p133
      // Predicated region
      $region9: #{input_process_forward.1} parent=5 // pred_check
        _
      $region10: #{input_process_forward.1} parent=5 // pred_check_branch
        %136 = sbr.rel (%p133) target = $region12
      $region11: #{input_process_forward.1} parent=5 // pred_region
        %s137 = ssub.s32 %s13, 1
        // Predicated region
        $region13: #{input_process_forward.1} parent=11 // pred_check
          %p138 = pneg %p74
        $region14: #{input_process_forward.1} parent=11 // pred_check_branch
          %140 = sbr.rel (%p138) target = $region16
        $region15: #{input_process_forward.1} parent=11 // pred_region
          %s142 = ssub.s32 512, 512
          %143 = vsyncadd [#allocation5], %s142
          %s144 = sshll.u32 [#allocation4], 4
          %s145 = int_to_ptr.vmem [resolvable:$true] %s144
          %150 = dma.hbm_to_vmem [thread:$0]  %s1, 512, %s145, [#allocation5], 128, 128, 8
        $region16: #{input_process_forward.1} parent=11 // pred_fallthru
          _
        // Predicated region
        $region17: #{input_process_forward.1} parent=11 // pred_check
          %p151 = pneg %p95
        $region18: #{input_process_forward.1} parent=11 // pred_check_branch
          %153 = sbr.rel (%p151) target = $region20
        $region19: #{input_process_forward.1} parent=11 // pred_region
          _
        $region20: #{input_process_forward.1} parent=11 // pred_fallthru
          _
      $region12: #{input_process_forward.1} parent=5 // pred_fallthru
        _
      %p154 = scmp.lt.s32.totalorder %s13, 2
      // Predicated region
      $region21: #{input_process_forward.1} parent=5 // pred_check
        %p155 = pneg %p154
      $region22: #{input_process_forward.1} parent=5 // pred_check_branch
        %157 = sbr.rel (%p155) target = $region24
      $region23: #{input_process_forward.1} parent=5 // pred_region
        // Predicated region
        $region25: #{input_process_forward.1} parent=23 // pred_check
          %p158 = pneg %p47
        $region26: #{input_process_forward.1} parent=23 // pred_check_branch
          %160 = sbr.rel (%p158) target = $region28
        $region27: #{input_process_forward.1} parent=23 // pred_region
          %s161 = sand.u32 %s37, 1
          %s162 = scalar_lea.sflag [#allocation3], %s161
          %s163 = sand.u32 %s37, 1
          %s164 = smul.addr %s163, 8
          %s165 = scalar_lea.vmem [#allocation2], %s164
          %s167 = ssub.s32 128, 128
          %168 = vsyncadd %s162, %s167
          %s169 = sadd.s32 %s21, %s20
          %s170 = smul.addr %s169, 128
          %s171 = scalar_lea.hbm %s0, %s170
          %s173 = sshll.u32 %s165, 4
          %s174 = int_to_ptr.vmem [resolvable:$true] %s173
          %176 = dma.hbm_to_vmem [thread:$0]  %s171, 128, %s174, %s162
        $region28: #{input_process_forward.1} parent=23 // pred_fallthru
          _
      $region24: #{input_process_forward.1} parent=5 // pred_fallthru
        _
      %p177 = scmp.le.s32.totalorder 1, %s13
      %p178 = scmp.lt.s32.totalorder %s13, 3
      %p179 = pnand %p177, %p178
      %p180 = pneg %p179
      // Predicated region
      $region29: #{input_process_forward.1} parent=5 // pred_check
        _
      $region30: #{input_process_forward.1} parent=5 // pred_check_branch
        %182 = sbr.rel (%p179) target = $region32
      $region31: #{input_process_forward.1} parent=5 // pred_region
        %s183 = ssub.s32 %s13, 1
        %s184 = sand.u32 %s40, 1
        %s185 = scalar_lea.sflag [#allocation3], %s184
        %s186 = sand.u32 %s40, 1
        %s187 = smul.addr %s186, 8
        %s188 = scalar_lea.vmem [#allocation2], %s187
        // Predicated region
        $region33: #{input_process_forward.1} parent=31 // pred_check
          %p189 = pneg %p53
        $region34: #{input_process_forward.1} parent=31 // pred_check_branch
          %191 = sbr.rel (%p189) target = $region36
        $region35: #{input_process_forward.1} parent=31 // pred_region
          %192 = dma.done %s185, 128
        $region36: #{input_process_forward.1} parent=31 // pred_fallthru
          _
        // Predicated region
        $region37: #{input_process_forward.1} parent=31 // pred_check
          %p193 = pneg %p74
        $region38: #{input_process_forward.1} parent=31 // pred_check_branch
          %195 = sbr.rel (%p193) target = $region40
        $region39: #{input_process_forward.1} parent=31 // pred_region
          %196 = dma.done [#allocation5], 512
        $region40: #{input_process_forward.1} parent=31 // pred_fallthru
          _
        %s197 = sand.u32 %s40, 1
        %s198 = scalar_lea.sflag [#allocation3], %s197
        %s199 = sand.u32 %s40, 1
        %s200 = smul.addr %s199, 8
        %s201 = scalar_lea.vmem [#allocation2], %s200
        %p202 = pneg %p53
        %p203 = pneg %p50
        %p204 = pneg %p74
        %p205 = pneg %p71
        %p206 = pneg %p95
        %p207 = pneg %p92
        %p208 = pneg %p123
        %p209 = pneg %p120
        %p210 = scmp.lt.s32.totalorder %s23, 0
        %s211 = scalar_select %p210, %s23, 0
        %p212 = scmp.lt.s32.totalorder %s22, 1
        %s213 = scalar_select %p212, %s22, 1
        %s214 = smul.addr %s211, 2
        %s215 = sadd.s32 %s213, %s214
        %s216 = smul.addr %s215, 8
        %s217 = scalar_lea.vmem %s3, %s216
        %p218 = scmp.lt.s32.totalorder %s23, 0
        %s219 = scalar_select %p218, %s23, 0
        %p220 = scmp.lt.s32.totalorder %s22, 1
        %s221 = scalar_select %p220, %s22, 1
        %s222 = smul.addr %s219, 2
        %s223 = sadd.s32 %s221, %s222
        %s224 = smul.addr %s223, 8
        %s225 = scalar_lea.vmem %s3, %s224
        %v226 = vld [vmem:[#allocation4] sm:$0xff]
        %v227 = vld [vmem:[#allocation4 + $0x8] sm:$0xff]
        %v228 = vld [vmem:[#allocation4 + $0x10] sm:$0xff]
        %v229 = vld [vmem:[#allocation4 + $0x18] sm:$0xff]
        %v230 = vld [vmem:[%s2] sm:$0x1]
        %v231 = vld [vmem:[%s188] sm:$0xff]
        %v233 = vlaneseq
        %v234 = vshrl.u32 %v233, 7
        %v235 = vsub.s32 0, %v234
        %v236 = vrot.slane %v230, %v235
        %vm238 = vcmask 261120
        %v240 = vsel %vm238, %v231, 0
        %242 = vmatprep.subr.mxu0 0.0
        %243 = vmatpush1.msra.mxu0 %v226
        %244 = vmatprep.subr.mxu0 0.0
        %245 = vmatpush1.msra.mxu0 %v227
        %246 = vmatprep.subr.mxu0 0.0
        %247 = vmatpush1.msra.mxu0 %v228
        %248 = vmatprep.subr.mxu0 0.0
        %249 = vmatpush1.msra.mxu0 %v229
        %250 = vmatprep.subr.mxu0 0.0
        %251 = vmatpush1.msra.mxu0 0.0
        %252 = vmatprep.subr.mxu0 0.0
        %253 = vmatpush1.msra.mxu0 0.0
        %254 = vmatprep.subr.mxu0 0.0
        %255 = vmatpush1.msra.mxu0 0.0
        %256 = vmatprep.subr.mxu0 0.0
        %257 = vmatpush1.msra.mxu0 0.0
        %258 = vmatprep.subr.mxu0 0.0
        %259 = vmatpush1.msra.mxu0 0.0
        %260 = vmatprep.subr.mxu0 0.0
        %261 = vmatpush1.msra.mxu0 0.0
        %262 = vmatprep.subr.mxu0 0.0
        %263 = vmatpush1.msra.mxu0 0.0
        %264 = vmatprep.subr.mxu0 0.0
        %265 = vmatpush1.msra.mxu0 0.0
        %266 = vmatprep.subr.mxu0 0.0
        %267 = vmatpush1.msra.mxu0 0.0
        %268 = vmatprep.subr.mxu0 0.0
        %269 = vmatpush1.msra.mxu0 0.0
        %270 = vmatprep.subr.mxu0 0.0
        %271 = vmatpush1.msra.mxu0 0.0
        %272 = vmatprep.subr.mxu0 0.0
        %273 = vmatpush1.msra.mxu0 0.0
        %274 = vmatprep.subr.mxu0 0.0
        %275 = vmatpush1.msra.mxu0 0.0
        %276 = vmatprep.subr.mxu0 0.0
        %277 = vmatpush1.msra.mxu0 0.0
        %278 = vmatprep.subr.mxu0 0.0
        %279 = vmatpush1.msra.mxu0 0.0
        %280 = vmatprep.subr.mxu0 0.0
        %281 = vmatpush1.msra.mxu0 0.0
        %282 = vmatprep.subr.mxu0 0.0
        %283 = vmatpush1.msra.mxu0 0.0
        %284 = vmatprep.subr.mxu0 0.0
        %285 = vmatpush1.msra.mxu0 0.0
        %286 = vmatprep.subr.mxu0 0.0
        %287 = vmatpush1.msra.mxu0 0.0
        %288 = vmatprep.subr.mxu0 0.0
        %289 = vmatpush1.msra.mxu0 0.0
        %290 = vmatprep.subr.mxu0 0.0
        %291 = vmatpush1.msra.mxu0 0.0
        %292 = vmatprep.subr.mxu0 0.0
        %293 = vmatpush1.msra.mxu0 0.0
        %294 = vmatprep.subr.mxu0 0.0
        %295 = vmatpush1.msra.mxu0 0.0
        %296 = vmatprep.subr.mxu0 0.0
        %297 = vmatpush1.msra.mxu0 0.0
        %298 = vmatprep.subr.mxu0 0.0
        %299 = vmatpush1.msra.mxu0 0.0
        %300 = vmatprep.subr.mxu0 0.0
        %301 = vmatpush1.msra.mxu0 0.0
        %302 = vmatprep.subr.mxu0 0.0
        %303 = vmatpush1.msra.mxu0 0.0
        %304 = vmatprep.subr.mxu0 0.0
        %305 = vmatpush1.msra.mxu0 0.0
        %306 = vmatprep.mubr.f32.mxu0 0.0
        %307 = vmatmul.mubr.f32.gmra.mrb[0].mxu0 %v240
        %v308 = vpop.f32.mrb[0].mxu0
        %v309 = vadd.f32 %v236, %v308
        %v310 = vpop.f32.mrb[0].mxu0
        %311 = vdwg.mxu0
        %312 = vst [vmem:[%s225] sm:$0xff] %v309
        %p313 = scmp.lt.s32.totalorder %s23, 0
        %s314 = scalar_select %p313, %s23, 0
        %p315 = scmp.lt.s32.totalorder %s22, 1
        %s316 = scalar_select %p315, %s22, 1
        %s317 = smul.addr %s314, 2
        %s318 = sadd.s32 %s316, %s317
        %s319 = smul.addr %s318, 8
        %s320 = scalar_lea.vmem %s3, %s319
        // Predicated region
        $region41: #{input_process_forward.1} parent=31 // pred_check
          %p321 = pneg %p120
        $region42: #{input_process_forward.1} parent=31 // pred_check_branch
          %323 = sbr.rel (%p321) target = $region44
        $region43: #{input_process_forward.1} parent=31 // pred_region
          _
        $region44: #{input_process_forward.1} parent=31 // pred_fallthru
          _
      $region32: #{input_process_forward.1} parent=5 // pred_fallthru
        _
      %p324 = scmp.le.s32.totalorder 2, %s13
      // Predicated region
      $region45: #{input_process_forward.1} parent=5 // pred_check
        %p325 = pneg %p324
      $region46: #{input_process_forward.1} parent=5 // pred_check_branch
        %327 = sbr.rel (%p325) target = $region48
      $region47: #{input_process_forward.1} parent=5 // pred_region
        %s328 = ssub.s32 %s13, 2
        // Predicated region
        $region49: #{input_process_forward.1} parent=47 // pred_check
          %p329 = pneg %p126
        $region50: #{input_process_forward.1} parent=47 // pred_check_branch
          %331 = sbr.rel (%p329) target = $region52
        $region51: #{input_process_forward.1} parent=47 // pred_region
          %p332 = scmp.lt.s32.totalorder %s25, 0
          %s333 = scalar_select %p332, %s25, 0
          %p334 = scmp.lt.s32.totalorder %s24, 1
          %s335 = scalar_select %p334, %s24, 1
          %s336 = smul.addr %s333, 2
          %s337 = sadd.s32 %s335, %s336
          %s338 = smul.addr %s337, 8
          %s339 = scalar_lea.vmem %s3, %s338
        $region52: #{input_process_forward.1} parent=47 // pred_fallthru
          _
      $region48: #{input_process_forward.1} parent=5 // pred_fallthru
        _
    $region6: #{input_process_forward.1} parent=1 // loop_footer
      %s17 = sadd.s32 1, %s13
    $region7: #{input_process_forward.1} parent=1 // loop_footer_branch
      %12 = sbr.rel target = $region3
    $region8: #{input_process_forward.1} parent=1 // loop_exit
      _
    %340 = vsyncpa [#allocation3], 1
    %s341 = scalar_lea.sflag [#allocation3], 1
    %342 = vsyncpa %s341, 1
    %343 = vsyncpa [#allocation5], 1

</llo_original>
